<compile_context>
chip_gen: v7x
topology: tpu7x:2x2x1
jax: 0.10.0
libtpu: 0.0.40
codegen_flags: <defaults>
</compile_context>

<pallas_src>
import functools
import math

import jax
import jax.numpy as jnp
from jax.experimental import pallas as pl
from jax.experimental.pallas import tpu as pltpu


_GELU_C = math.sqrt(2.0 / math.pi)


def _gelu_f32(y):
    """BERT/GPT tanh-approx GELU, computed in f32."""
    return 0.5 * y * (1.0 + jnp.tanh(_GELU_C * (y + 0.044715 * (y * y * y))))


def _round_up(x, m):
    return ((x + m - 1) // m) * m


def _pad2(a, rows, cols):
    pr, pc = rows - a.shape[0], cols - a.shape[1]
    if pr or pc:
        a = jnp.pad(a, ((0, pr), (0, pc)))
    return a


def _vmem_capacity_bytes():
    """Physical VMEM per TensorCore; conservative 64 MiB fallback (v7x-sized)."""
    try:
        return int(pltpu.get_tpu_info().vmem_capacity_bytes)
    except Exception:
        return 64 << 20


def _sublane_multiple(dtype):
    """Sublane packing multiple: 8 for f32, 16 for bf16, 32 for int8/fp8."""
    return max(8, 32 // jnp.dtype(dtype).itemsize)


def _operand_dtype(x_dtype, mxu_dtype):
    """dtype actually fed to the MXU (optionally down-cast, never up-cast)."""
    if mxu_dtype is not None and (jnp.dtype(mxu_dtype).itemsize
                                  < jnp.dtype(x_dtype).itemsize):
        return jnp.dtype(mxu_dtype)
    return jnp.dtype(x_dtype)


# ---------------------------------------------------------------------------
# Per-layer tiled Linear (+ optional GELU): grid = (M/tm, N/tn, K/tk)
# ---------------------------------------------------------------------------

def _linear_tiled_kernel(x_ref, w_ref, b_ref, o_ref, acc_ref, *, apply_gelu):
    k = pl.program_id(2)

    @pl.when(k == 0)
    def _():
        # Fold the bias into the accumulator init (saves a full VPU add pass).
        acc_ref[...] = jnp.broadcast_to(
            b_ref[...].astype(jnp.float32), acc_ref.shape)

    # Native/operand-dtype tiles straight to the MXU; accumulate in f32.
    acc_ref[...] += jnp.dot(x_ref[...], w_ref[...],
                            preferred_element_type=jnp.float32)

    @pl.when(k == pl.num_programs(2) - 1)
    def _():
        y = acc_ref[...]
        if apply_gelu:
            y = _gelu_f32(y)
        o_ref[...] = y.astype(o_ref.dtype)


def pallas_linear(x, w, b, *, apply_gelu: bool, mxu_dtype=None):
    """x: (B, K), w: (K, N), b: (N,) -> (B, N), fused matmul+bias(+GELU)."""
    B, K = x.shape
    K2, N = w.shape
    assert K == K2
    out_dtype = x.dtype
    op_dtype = _operand_dtype(x.dtype, mxu_dtype)
    in_dbytes = jnp.dtype(op_dtype).itemsize
    out_dbytes = jnp.dtype(out_dtype).itemsize

    cap = _vmem_capacity_bytes()
    if cap >= (100 << 20):
        # 128 MiB parts (v5e/v6e): bigger tiles halve W/x HBM re-reads and
        # amortize the ~0.35us per-grid-step overhead.
        tm_max, tn_max, tk_max = 512, 512, 1024
    else:
        # 64 MiB (v7x) or unknown: conservative, roofline is compute-leaning.
        tm_max, tn_max, tk_max = 256, 256, 512

    sub = _sublane_multiple(op_dtype)
    tm = min(tm_max, _round_up(B, sub))
    tn = min(tn_max, _round_up(N, 128))
    tk = min(tk_max, _round_up(K, 128))

    Bp, Kp, Np = _round_up(B, tm), _round_up(K, tk), _round_up(N, tn)
    xp = _pad2(x, Bp, Kp).astype(op_dtype)
    wp = _pad2(w, Kp, Np).astype(op_dtype)
    bp = _pad2(b.reshape(1, N).astype(jnp.float32), 1, Np)

    grid = (Bp // tm, Np // tn, Kp // tk)

    # Double-buffered inputs/outputs + f32 accumulator, 2x headroom, capped at
    # ~75% of the chip's physical VMEM.
    vmem_est = (2 * (tm * tk + tk * tn) * in_dbytes + 2 * tn * 4
                + 2 * tm * tn * out_dbytes + tm * tn * 4)
    vmem_limit = int(min(max(2 * vmem_est, 16 << 20), int(0.75 * cap)))

    cost = pl.CostEstimate(
        flops=2 * Bp * Kp * Np,
        transcendentals=(Bp * Np if apply_gelu else 0),
        bytes_accessed=((Bp * Kp + Kp * Np) * in_dbytes
                        + Bp * Np * out_dbytes + Np * 4),
    )

    kernel = functools.partial(_linear_tiled_kernel, apply_gelu=apply_gelu)
    out = pl.pallas_call(
        kernel,
        out_shape=jax.ShapeDtypeStruct((Bp, Np), out_dtype),
        grid_spec=pltpu.PrefetchScalarGridSpec(
            num_scalar_prefetch=0,
            grid=grid,
            in_specs=[
                pl.BlockSpec((tm, tk), lambda i, j, k: (i, k)),
                pl.BlockSpec((tk, tn), lambda i, j, k: (k, j)),
                pl.BlockSpec((1, tn), lambda i, j, k: (0, j)),
            ],
            out_specs=pl.BlockSpec((tm, tn), lambda i, j, k: (i, j)),
            scratch_shapes=[pltpu.VMEM((tm, tn), jnp.float32)],
        ),
        compiler_params=pltpu.CompilerParams(
            dimension_semantics=("parallel", "parallel", "arbitrary"),
            vmem_limit_bytes=vmem_limit,
        ),
        cost_estimate=cost,
    )(xp, wp, bp)
    return out[:B, :N]


# ---------------------------------------------------------------------------
# Fully fused MLP: weights resident in VMEM, grid tiles only the batch dim,
# hidden activations never leave VMEM.
# ---------------------------------------------------------------------------

def _fused_mlp_kernel(*refs):
    x_ref = refs[0]
    o_ref = refs[-1]
    wb = refs[1:-1]
    num_linear = len(wb) // 2

    h = x_ref[...]
    for i in range(num_linear):
        w = wb[2 * i][...]
        b = wb[2 * i + 1][...].astype(jnp.float32)
        y = jnp.dot(h, w, preferred_element_type=jnp.float32) + b
        if i < num_linear - 1:
            y = _gelu_f32(y)
            h = y.astype(x_ref.dtype)   # keep matmul inputs in operand dtype
        else:
            h = y
    o_ref[...] = h.astype(o_ref.dtype)


def pallas_mlp_fused(params, x, *, mxu_dtype=None):
    """Whole-MLP single pallas_call.  Returns None if weights don't fit VMEM."""
    B, K = x.shape
    out_dtype = x.dtype
    op_dtype = _operand_dtype(x.dtype, mxu_dtype)
    in_dbytes = jnp.dtype(op_dtype).itemsize
    out_dbytes = jnp.dtype(out_dtype).itemsize
    num_linear = len(params)

    cap = _vmem_capacity_bytes()
    sub = _sublane_multiple(op_dtype)
    tm = min(256, _round_up(B, sub))
    Bp = _round_up(B, tm)
    # v7x shards the parallel grid axis across its 2 TensorCores: make sure the
    # batch grid has at least 2 steps whenever the batch allows it.
    if Bp // tm < 2 and tm > sub:
        tm = max(sub, _round_up(tm // 2, sub))
        Bp = _round_up(B, tm)

    dims = [K] + [w.shape[1] for (w, _) in params]
    dims_p = [_round_up(d, 128) for d in dims]

    w_bytes = sum(dims_p[i] * dims_p[i + 1] * in_dbytes + dims_p[i + 1] * 4
                  for i in range(num_linear))
    io_bytes = 2 * tm * dims_p[0] * in_dbytes + 2 * tm * dims_p[-1] * out_dbytes
    act_bytes = 4 * tm * max(dims_p) * 4     # f32 activation temporaries
    # Pallas double-buffers every input by default, so resident weights cost
    # ~2x their raw size; count that so we never overshoot vmem_limit_bytes.
    vmem_est = 2 * w_bytes + io_bytes + act_bytes
    if vmem_est > int(0.70 * cap):
        return None                          # too big; fall back to tiled path
    vmem_limit = int(min(max(int(1.25 * vmem_est), 16 << 20), int(0.80 * cap)))

    xp = _pad2(x, Bp, dims_p[0]).astype(op_dtype)
    args = [xp]
    in_specs = [pl.BlockSpec((tm, dims_p[0]), lambda i: (i, 0))]
    for li, (w, b) in enumerate(params):
        n_out = dims[li + 1]
        args.append(_pad2(w, dims_p[li], dims_p[li + 1]).astype(op_dtype))
        args.append(_pad2(b.reshape(1, n_out).astype(jnp.float32),
                          1, dims_p[li + 1]))
        in_specs.append(
            pl.BlockSpec((dims_p[li], dims_p[li + 1]), lambda i: (0, 0)))
        in_specs.append(pl.BlockSpec((1, dims_p[li + 1]), lambda i: (0, 0)))

    cost = pl.CostEstimate(
        flops=sum(2 * Bp * dims_p[i] * dims_p[i + 1] for i in range(num_linear)),
        transcendentals=sum(Bp * dims_p[i + 1] for i in range(num_linear - 1)),
        bytes_accessed=(w_bytes + Bp * dims_p[0] * in_dbytes
                        + Bp * dims_p[-1] * out_dbytes),
    )

    out = pl.pallas_call(
        _fused_mlp_kernel,
        out_shape=jax.ShapeDtypeStruct((Bp, dims_p[-1]), out_dtype),
        grid_spec=pltpu.PrefetchScalarGridSpec(
            num_scalar_prefetch=0,
            grid=(Bp // tm,),
            in_specs=in_specs,
            out_specs=pl.BlockSpec((tm, dims_p[-1]), lambda i: (i, 0)),
        ),
        compiler_params=pltpu.CompilerParams(
            dimension_semantics=("parallel",),
            vmem_limit_bytes=vmem_limit,
        ),
        cost_estimate=cost,
    )(*args)
    return out[:B, :dims[-1]]


# ---------------------------------------------------------------------------
# MLP forward (eval mode: Dropout is identity)
# ---------------------------------------------------------------------------

def mlp_forward_layered(params, x, *, mxu_dtype=None):
    """Per-layer tiled path (used when weights don't fit VMEM)."""
    num_layers = len(params) - 1
    h = x
    for i, (w, b) in enumerate(params):
        h = pallas_linear(h, w, b, apply_gelu=(i < num_layers),
                          mxu_dtype=mxu_dtype)
    return h


def mlp_forward(params, x, *, mxu_dtype=None):
    """Forward pass of MLP (eval mode: Dropout is identity)."""
    # TODO(synk): training-mode Dropout (stochastic masking) not applied; this
    # reproduces nn.Module eval()/inference semantics.
    fused = pallas_mlp_fused(params, x, mxu_dtype=mxu_dtype)
    if fused is not None:
        return fused
    return mlp_forward_layered(params, x, mxu_dtype=mxu_dtype)


# ---------------------------------------------------------------------------
# Params init + plain-JAX reference
# ---------------------------------------------------------------------------

def init_mlp_params(key, input_size, hidden_size, output_size, num_layers,
                    dtype=jnp.float32):
    """Deterministic init mimicking nn.Linear default (uniform +-1/sqrt(n_in))."""
    params = []
    for i in range(num_layers + 1):
        n_in = input_size if i == 0 else hidden_size
        n_out = hidden_size if i < num_layers else output_size
        key, kw, kb = jax.random.split(key, 3)
        bound = 1.0 / math.sqrt(n_in)
        w = jax.random.uniform(kw, (n_in, n_out), dtype, -bound, bound)
        b = jax.random.uniform(kb, (n_out,), dtype, -bound, bound)
        params.append((w, b))
    return params


def mlp_reference(params, x):
    num_layers = len(params) - 1
    h = x
    for i, (w, b) in enumerate(params):
        h = h @ w + b
        if i < num_layers:
            h = _gelu_f32(h)
    return h


if __name__ == "__main__":
    key = jax.random.PRNGKey(0)
    batch = 8
    input_size, hidden_size, output_size = 32, 64, 16
    num_layers = 2

    key, kx = jax.random.split(key)
    x = jax.random.normal(kx, (batch, input_size), dtype=jnp.float32)
    params = init_mlp_params(key, input_size, hidden_size, output_size, num_layers)

    ref = mlp_reference(params, x)

    # Fused whole-MLP path (weights resident in VMEM), f32 operands.
    out_fused = jax.block_until_ready(mlp_forward(params, x))
    assert out_fused.shape == (batch, output_size)
    assert jnp.allclose(out_fused, ref, atol=1e-4, rtol=1e-4), "fused mismatch"

    # Per-layer tiled path (grid + f32 accumulator) exercised as well.
    out_tiled = jax.block_until_ready(mlp_forward_layered(params, x))
    assert out_tiled.shape == (batch, output_size)
    assert jnp.allclose(out_tiled, ref, atol=1e-4, rtol=1e-4), "tiled mismatch"

    # bf16-MXU fast path: operands cast to bf16, accumulate + GELU in f32.
    out_bf16 = jax.block_until_ready(mlp_forward(params, x, mxu_dtype=jnp.bfloat16))
    assert out_bf16.shape == (batch, output_size)
    assert jnp.allclose(out_bf16, ref, atol=1e-1, rtol=1e-1), "bf16 MXU mismatch"

    print("KERNEL_OK")
</pallas_src>

<mosaic_0001>
module attributes {stable_mosaic.version = 11 : i64} {
  func.func @_fused_mlp_kernel(%arg0: i32, %arg1: memref<8x128xf32, #tpu.memory_space<vmem>>, %arg2: memref<128x128xf32, #tpu.memory_space<vmem>>, %arg3: memref<1x128xf32, #tpu.memory_space<vmem>>, %arg4: memref<128x128xf32, #tpu.memory_space<vmem>>, %arg5: memref<1x128xf32, #tpu.memory_space<vmem>>, %arg6: memref<128x128xf32, #tpu.memory_space<vmem>>, %arg7: memref<1x128xf32, #tpu.memory_space<vmem>>, %arg8: memref<8x128xf32, #tpu.memory_space<vmem>>) attributes {dimension_semantics = [#tpu.dimension_semantics<parallel>], iteration_bounds = array<i64: 1>, scalar_prefetch = 0 : i64, scratch_operands = 0 : i64, tpu.core_type = #tpu.core_type<tc>, window_params = [{transform_indices = @transform_0, window_bounds = array<i64: 8, 128>}, {pipeline_mode = #tpu.pipeline_mode<synchronous>, transform_indices = @transform_1, window_bounds = array<i64: 128, 128>}, {pipeline_mode = #tpu.pipeline_mode<synchronous>, transform_indices = @transform_2, window_bounds = array<i64: 1, 128>}, {pipeline_mode = #tpu.pipeline_mode<synchronous>, transform_indices = @transform_3, window_bounds = array<i64: 128, 128>}, {pipeline_mode = #tpu.pipeline_mode<synchronous>, transform_indices = @transform_4, window_bounds = array<i64: 1, 128>}, {pipeline_mode = #tpu.pipeline_mode<synchronous>, transform_indices = @transform_5, window_bounds = array<i64: 128, 128>}, {pipeline_mode = #tpu.pipeline_mode<synchronous>, transform_indices = @transform_6, window_bounds = array<i64: 1, 128>}, {transform_indices = @transform_7, window_bounds = array<i64: 8, 128>}]} {
    %c0 = arith.constant 0 : index
    %c0_0 = arith.constant 0 : index
    %0 = vector.load %arg1[%c0, %c0_0] : memref<8x128xf32, #tpu.memory_space<vmem>>, vector<8x128xf32>
    %c0_1 = arith.constant 0 : index
    %c0_2 = arith.constant 0 : index
    %1 = vector.load %arg2[%c0_1, %c0_2] : memref<128x128xf32, #tpu.memory_space<vmem>>, vector<128x128xf32>
    %c0_3 = arith.constant 0 : index
    %c0_4 = arith.constant 0 : index
    %2 = vector.load %arg3[%c0_3, %c0_4] : memref<1x128xf32, #tpu.memory_space<vmem>>, vector<1x128xf32>
    %cst = arith.constant dense<0.000000e+00> : vector<8x128xf32>
    %3 = tpu.matmul %0, %1, %cst {dimension_numbers = #tpu.dot_dimension_numbers<[1], [0], [0], [1], [0, 0, 1, 1], [], []>} : vector<8x128xf32>, vector<128x128xf32>, vector<8x128xf32> -> vector<8x128xf32>
    %4 = vector.broadcast %2 : vector<1x128xf32> to vector<8x128xf32>
    %5 = arith.addf %3, %4 : vector<8x128xf32>
    %cst_5 = arith.constant 5.000000e-01 : f32
    %6 = vector.broadcast %cst_5 : f32 to vector<8x128xf32>
    %7 = arith.mulf %6, %5 : vector<8x128xf32>
    %8 = arith.mulf %5, %5 : vector<8x128xf32>
    %9 = arith.mulf %8, %5 : vector<8x128xf32>
    %cst_6 = arith.constant 4.471500e-02 : f32
    %10 = vector.broadcast %cst_6 : f32 to vector<8x128xf32>
    %11 = arith.mulf %10, %9 : vector<8x128xf32>
    %12 = arith.addf %5, %11 : vector<8x128xf32>
    %cst_7 = arith.constant 0.797884583 : f32
    %13 = vector.broadcast %cst_7 : f32 to vector<8x128xf32>
    %14 = arith.mulf %13, %12 : vector<8x128xf32>
    %15 = math.tanh %14 : vector<8x128xf32>
    %cst_8 = arith.constant 1.000000e+00 : f32
    %16 = vector.broadcast %cst_8 : f32 to vector<8x128xf32>
    %17 = arith.addf %16, %15 : vector<8x128xf32>
    %18 = arith.mulf %7, %17 : vector<8x128xf32>
    %c0_9 = arith.constant 0 : index
    %c0_10 = arith.constant 0 : index
    %19 = vector.load %arg4[%c0_9, %c0_10] : memref<128x128xf32, #tpu.memory_space<vmem>>, vector<128x128xf32>
    %c0_11 = arith.constant 0 : index
    %c0_12 = arith.constant 0 : index
    %20 = vector.load %arg5[%c0_11, %c0_12] : memref<1x128xf32, #tpu.memory_space<vmem>>, vector<1x128xf32>
    %cst_13 = arith.constant dense<0.000000e+00> : vector<8x128xf32>
    %21 = tpu.matmul %18, %19, %cst_13 {dimension_numbers = #tpu.dot_dimension_numbers<[1], [0], [0], [1], [0, 0, 1, 1], [], []>} : vector<8x128xf32>, vector<128x128xf32>, vector<8x128xf32> -> vector<8x128xf32>
    %22 = vector.broadcast %20 : vector<1x128xf32> to vector<8x128xf32>
    %23 = arith.addf %21, %22 : vector<8x128xf32>
    %cst_14 = arith.constant 5.000000e-01 : f32
    %24 = vector.broadcast %cst_14 : f32 to vector<8x128xf32>
    %25 = arith.mulf %24, %23 : vector<8x128xf32>
    %26 = arith.mulf %23, %23 : vector<8x128xf32>
    %27 = arith.mulf %26, %23 : vector<8x128xf32>
    %cst_15 = arith.constant 4.471500e-02 : f32
    %28 = vector.broadcast %cst_15 : f32 to vector<8x128xf32>
    %29 = arith.mulf %28, %27 : vector<8x128xf32>
    %30 = arith.addf %23, %29 : vector<8x128xf32>
    %cst_16 = arith.constant 0.797884583 : f32
    %31 = vector.broadcast %cst_16 : f32 to vector<8x128xf32>
    %32 = arith.mulf %31, %30 : vector<8x128xf32>
    %33 = math.tanh %32 : vector<8x128xf32>
    %cst_17 = arith.constant 1.000000e+00 : f32
    %34 = vector.broadcast %cst_17 : f32 to vector<8x128xf32>
    %35 = arith.addf %34, %33 : vector<8x128xf32>
    %36 = arith.mulf %25, %35 : vector<8x128xf32>
    %c0_18 = arith.constant 0 : index
    %c0_19 = arith.constant 0 : index
    %37 = vector.load %arg6[%c0_18, %c0_19] : memref<128x128xf32, #tpu.memory_space<vmem>>, vector<128x128xf32>
    %c0_20 = arith.constant 0 : index
    %c0_21 = arith.constant 0 : index
    %38 = vector.load %arg7[%c0_20, %c0_21] : memref<1x128xf32, #tpu.memory_space<vmem>>, vector<1x128xf32>
    %cst_22 = arith.constant dense<0.000000e+00> : vector<8x128xf32>
    %39 = tpu.matmul %36, %37, %cst_22 {dimension_numbers = #tpu.dot_dimension_numbers<[1], [0], [0], [1], [0, 0, 1, 1], [], []>} : vector<8x128xf32>, vector<128x128xf32>, vector<8x128xf32> -> vector<8x128xf32>
    %40 = vector.broadcast %38 : vector<1x128xf32> to vector<8x128xf32>
    %41 = arith.addf %39, %40 : vector<8x128xf32>
    %c0_23 = arith.constant 0 : index
    %c0_24 = arith.constant 0 : index
    %42 = vector.load %arg8[%c0_23, %c0_24] : memref<8x128xf32, #tpu.memory_space<vmem>>, vector<8x128xf32>
    tpu.vector_store %arg8[%c0_23, %c0_24], %41 {strides = array<i32>} : memref<8x128xf32, #tpu.memory_space<vmem>>, vector<8x128xf32>,
    return
  }
  func.func @transform_0(%arg0: i32) -> (i32, i32) {
    %c0_i32 = arith.constant 0 : i32
    %c0_i32_0 = arith.constant 0 : i32
    return %arg0, %c0_i32 : i32, i32
  }
  func.func @transform_1(%arg0: i32) -> (i32, i32) {
    %c0_i32 = arith.constant 0 : i32
    %c0_i32_0 = arith.constant 0 : i32
    %c0_i32_1 = arith.constant 0 : i32
    return %c0_i32, %c0_i32_0 : i32, i32
  }
  func.func @transform_2(%arg0: i32) -> (i32, i32) {
    %c0_i32 = arith.constant 0 : i32
    %c0_i32_0 = arith.constant 0 : i32
    %c0_i32_1 = arith.constant 0 : i32
    return %c0_i32, %c0_i32_0 : i32, i32
  }
  func.func @transform_3(%arg0: i32) -> (i32, i32) {
    %c0_i32 = arith.constant 0 : i32
    %c0_i32_0 = arith.constant 0 : i32
    %c0_i32_1 = arith.constant 0 : i32
    return %c0_i32, %c0_i32_0 : i32, i32
  }
  func.func @transform_4(%arg0: i32) -> (i32, i32) {
    %c0_i32 = arith.constant 0 : i32
    %c0_i32_0 = arith.constant 0 : i32
    %c0_i32_1 = arith.constant 0 : i32
    return %c0_i32, %c0_i32_0 : i32, i32
  }
  func.func @transform_5(%arg0: i32) -> (i32, i32) {
    %c0_i32 = arith.constant 0 : i32
    %c0_i32_0 = arith.constant 0 : i32
    %c0_i32_1 = arith.constant 0 : i32
    return %c0_i32, %c0_i32_0 : i32, i32
  }
  func.func @transform_6(%arg0: i32) -> (i32, i32) {
    %c0_i32 = arith.constant 0 : i32
    %c0_i32_0 = arith.constant 0 : i32
    %c0_i32_1 = arith.constant 0 : i32
    return %c0_i32, %c0_i32_0 : i32, i32
  }
  func.func @transform_7(%arg0: i32) -> (i32, i32) {
    %c0_i32 = arith.constant 0 : i32
    %c0_i32_0 = arith.constant 0 : i32
    return %arg0, %c0_i32 : i32, i32
  }
}

</mosaic_0001>

<llo_original>
// kernel: tpu_custom_call.1
$region0: #{tpu_custom_call.1}
  #allocation0 [shape = 'u32[]', space=smem, size = 0x4, offset = 0x4, fixed_abs, tag = 'smem constant byte address 0x4 - core index']
  #allocation1 [shape = 'u32[144,128]{1,0:T(1,128)}', space=vmem, size = 0x12000, scoped, tag = 'internal scratch']
  %s0 = inlined_call_operand.hbm [shape: f32[8,128], index: 0, kind: input, shape index: {}]
  %s1 = inlined_call_operand.hbm [shape: f32[128,128], index: 1, kind: input, shape index: {}]
  %s2 = inlined_call_operand.vmem [shape: f32[1,128], index: 2, kind: input, shape index: {}]
  %s3 = inlined_call_operand.hbm [shape: f32[128,128], index: 3, kind: input, shape index: {}]
  %s4 = inlined_call_operand.vmem [shape: f32[1,128], index: 4, kind: input, shape index: {}]
  %s5 = inlined_call_operand.hbm [shape: f32[128,128], index: 5, kind: input, shape index: {}]
  %s6 = inlined_call_operand.vmem [shape: f32[1,128], index: 6, kind: input, shape index: {}]
  %s7 = inlined_call_operand.hbm [shape: f32[8,128], index: 7, kind: output, shape index: {}]
  %s8 = sld [smem:[#allocation0]]
  $region54: #{tpu_custom_call.1} parent=0
    _
  %s10 = ssub.s32 1, %s8
  %s11 = scalar_select 0, %s10, %s8
  $region1: #{tpu_custom_call.1} parent=0
    #allocation2 [shape = 'u8[4096]{0}', space=vmem, size = 0x1000, scoped, tag = 'input window, operand 0, single buffered']
    #allocation3 [shape = 's32[1]{0}', space=sflag, size = 0x4, scoped, tag = 'scoped memory for tpu_custom_call.1']
    #allocation4 [shape = 's32[1]{0}', space=sflag, size = 0x4, scoped, tag = 'scoped memory for tpu_custom_call.1']
    #allocation5 [shape = 'u8[65536]{0}', space=vmem, size = 0x10000, scoped, tag = 'input window, operand 1, single buffered']
    #allocation6 [shape = 's32[1]{0}', space=sflag, size = 0x4, scoped, tag = 'scoped memory for tpu_custom_call.1']
    #allocation7 [shape = 'u8[65536]{0}', space=vmem, size = 0x10000, scoped, tag = 'input window, operand 3, single buffered']
    #allocation8 [shape = 'u8[65536]{0}', space=vmem, size = 0x10000, scoped, tag = 'input window, operand 5, single buffered']
    #allocation9 [shape = 's32[1]{0}', space=sflag, size = 0x4, scoped, tag = 'scoped memory for tpu_custom_call.1']
    #allocation10 [shape = 'u8[4096]{0}', space=vmem, size = 0x1000, scoped, tag = 'output window, operand 0, single buffered']
    %12 = vsyncpa [#allocation3], 0
    %13 = vsyncpa [#allocation6], 0
    %14 = vsyncpa [#allocation9], 0
    %15 = vsyncpa [#allocation4], 0
    // Predicated region
    $region2: #{tpu_custom_call.1} parent=1 // pred_check
      _
    $region3: #{tpu_custom_call.1} parent=1 // pred_check_branch
      %17 = sbr.rel (0) target = $region5
    $region4: #{tpu_custom_call.1} parent=1 // pred_region
      %s19 = ssub.s32 128, 128
      %20 = vsyncadd [#allocation3], %s19
      %s22 = sshll.u32 [#allocation2], 4
      %s23 = int_to_ptr.vmem [resolvable:$true] %s22
      %25 = dma.hbm_to_vmem [thread:$0]  %s0, 128, %s23, [#allocation3]
    $region5: #{tpu_custom_call.1} parent=1 // pred_fallthru
      _
    // Predicated region
    $region6: #{tpu_custom_call.1} parent=1 // pred_check
      _
    $region7: #{tpu_custom_call.1} parent=1 // pred_check_branch
      %27 = sbr.rel (0) target = $region9
    $region8: #{tpu_custom_call.1} parent=1 // pred_region
      %s29 = ssub.s32 2048, 2048
      %30 = vsyncadd [#allocation6], %s29
      %s31 = sshll.u32 [#allocation5], 4
      %s32 = int_to_ptr.vmem [resolvable:$true] %s31
      %37 = dma.hbm_to_vmem [thread:$0]  %s1, 2048, %s32, [#allocation6], 128, 128, 8
    $region9: #{tpu_custom_call.1} parent=1 // pred_fallthru
      _
    // Predicated region
    $region10: #{tpu_custom_call.1} parent=1 // pred_check
      _
    $region11: #{tpu_custom_call.1} parent=1 // pred_check_branch
      %39 = sbr.rel (0) target = $region13
    $region12: #{tpu_custom_call.1} parent=1 // pred_region
      _
    $region13: #{tpu_custom_call.1} parent=1 // pred_fallthru
      _
    // Predicated region
    $region14: #{tpu_custom_call.1} parent=1 // pred_check
      _
    $region15: #{tpu_custom_call.1} parent=1 // pred_check_branch
      %41 = sbr.rel (0) target = $region17
    $region16: #{tpu_custom_call.1} parent=1 // pred_region
      %s43 = ssub.s32 2048, 2048
      %44 = vsyncadd [#allocation6], %s43
      %s45 = sshll.u32 [#allocation7], 4
      %s46 = int_to_ptr.vmem [resolvable:$true] %s45
      %51 = dma.hbm_to_vmem [thread:$0]  %s3, 2048, %s46, [#allocation6], 128, 128, 8
    $region17: #{tpu_custom_call.1} parent=1 // pred_fallthru
      _
    // Predicated region
    $region18: #{tpu_custom_call.1} parent=1 // pred_check
      _
    $region19: #{tpu_custom_call.1} parent=1 // pred_check_branch
      %53 = sbr.rel (0) target = $region21
    $region20: #{tpu_custom_call.1} parent=1 // pred_region
      _
    $region21: #{tpu_custom_call.1} parent=1 // pred_fallthru
      _
    // Predicated region
    $region22: #{tpu_custom_call.1} parent=1 // pred_check
      _
    $region23: #{tpu_custom_call.1} parent=1 // pred_check_branch
      %55 = sbr.rel (0) target = $region25
    $region24: #{tpu_custom_call.1} parent=1 // pred_region
      %s57 = ssub.s32 2048, 2048
      %58 = vsyncadd [#allocation9], %s57
      %s59 = sshll.u32 [#allocation8], 4
      %s60 = int_to_ptr.vmem [resolvable:$true] %s59
      %65 = dma.hbm_to_vmem [thread:$0]  %s5, 2048, %s60, [#allocation9], 128, 128, 8
    $region25: #{tpu_custom_call.1} parent=1 // pred_fallthru
      _
    // Predicated region
    $region26: #{tpu_custom_call.1} parent=1 // pred_check
      _
    $region27: #{tpu_custom_call.1} parent=1 // pred_check_branch
      %67 = sbr.rel (0) target = $region29
    $region28: #{tpu_custom_call.1} parent=1 // pred_region
      _
    $region29: #{tpu_custom_call.1} parent=1 // pred_fallthru
      _
    // Predicated region
    $region30: #{tpu_custom_call.1} parent=1 // pred_check
      _
    $region31: #{tpu_custom_call.1} parent=1 // pred_check_branch
      %69 = sbr.rel (0) target = $region33
    $region32: #{tpu_custom_call.1} parent=1 // pred_region
      %70 = dma.done [#allocation3], 128
    $region33: #{tpu_custom_call.1} parent=1 // pred_fallthru
      _
    // Predicated region
    $region34: #{tpu_custom_call.1} parent=1 // pred_check
      _
    $region35: #{tpu_custom_call.1} parent=1 // pred_check_branch
      %72 = sbr.rel (0) target = $region37
    $region36: #{tpu_custom_call.1} parent=1 // pred_region
      %73 = dma.done [#allocation6], 2048
    $region37: #{tpu_custom_call.1} parent=1 // pred_fallthru
      _
    // Predicated region
    $region38: #{tpu_custom_call.1} parent=1 // pred_check
      _
    $region39: #{tpu_custom_call.1} parent=1 // pred_check_branch
      %75 = sbr.rel (0) target = $region41
    $region40: #{tpu_custom_call.1} parent=1 // pred_region
      %76 = dma.done [#allocation6], 2048
    $region41: #{tpu_custom_call.1} parent=1 // pred_fallthru
      _
    // Predicated region
    $region42: #{tpu_custom_call.1} parent=1 // pred_check
      _
    $region43: #{tpu_custom_call.1} parent=1 // pred_check_branch
      %78 = sbr.rel (0) target = $region45
    $region44: #{tpu_custom_call.1} parent=1 // pred_region
      %79 = dma.done [#allocation9], 2048
    $region45: #{tpu_custom_call.1} parent=1 // pred_fallthru
      _
    %v80 = vld [vmem:[#allocation2] sm:$0xff]
    %v81 = vld [vmem:[#allocation5] sm:$0xff]
    %v82 = vld [vmem:[#allocation5 + $0x8] sm:$0xff]
    %v83 = vld [vmem:[#allocation5 + $0x10] sm:$0xff]
    %v84 = vld [vmem:[#allocation5 + $0x18] sm:$0xff]
    %v85 = vld [vmem:[#allocation5 + $0x20] sm:$0xff]
    %v86 = vld [vmem:[#allocation5 + $0x28] sm:$0xff]
    %v87 = vld [vmem:[#allocation5 + $0x30] sm:$0xff]
    %v88 = vld [vmem:[#allocation5 + $0x38] sm:$0xff]
    %v89 = vld [vmem:[#allocation5 + $0x40] sm:$0xff]
    %v90 = vld [vmem:[#allocation5 + $0x48] sm:$0xff]
    %v91 = vld [vmem:[#allocation5 + $0x50] sm:$0xff]
    %v92 = vld [vmem:[#allocation5 + $0x58] sm:$0xff]
    %v93 = vld [vmem:[#allocation5 + $0x60] sm:$0xff]
    %v94 = vld [vmem:[#allocation5 + $0x68] sm:$0xff]
    %v95 = vld [vmem:[#allocation5 + $0x70] sm:$0xff]
    %v96 = vld [vmem:[#allocation5 + $0x78] sm:$0xff]
    %v97 = vld [vmem:[%s2] sm:$0x1]
    %v99 = vlaneseq
    %v100 = vshrl.u32 %v99, 7
    %v101 = vsub.s32 0, %v100
    %v102 = vrot.slane %v97, %v101
    %104 = vmatprep.subr.mxu0 0.0
    %105 = vmatpush1.msra.mxu0 %v81
    %106 = vmatprep.subr.mxu0 0.0
    %107 = vmatpush1.msra.mxu0 %v82
    %108 = vmatprep.subr.mxu0 0.0
    %109 = vmatpush1.msra.mxu0 %v83
    %110 = vmatprep.subr.mxu0 0.0
    %111 = vmatpush1.msra.mxu0 %v84
    %112 = vmatprep.subr.mxu0 0.0
    %113 = vmatpush1.msra.mxu0 %v85
    %114 = vmatprep.subr.mxu0 0.0
    %115 = vmatpush1.msra.mxu0 %v86
    %116 = vmatprep.subr.mxu0 0.0
    %117 = vmatpush1.msra.mxu0 %v87
    %118 = vmatprep.subr.mxu0 0.0
    %119 = vmatpush1.msra.mxu0 %v88
    %120 = vmatprep.subr.mxu0 0.0
    %121 = vmatpush1.msra.mxu0 %v89
    %122 = vmatprep.subr.mxu0 0.0
    %123 = vmatpush1.msra.mxu0 %v90
    %124 = vmatprep.subr.mxu0 0.0
    %125 = vmatpush1.msra.mxu0 %v91
    %126 = vmatprep.subr.mxu0 0.0
    %127 = vmatpush1.msra.mxu0 %v92
    %128 = vmatprep.subr.mxu0 0.0
    %129 = vmatpush1.msra.mxu0 %v93
    %130 = vmatprep.subr.mxu0 0.0
    %131 = vmatpush1.msra.mxu0 %v94
    %132 = vmatprep.subr.mxu0 0.0
    %133 = vmatpush1.msra.mxu0 %v95
    %134 = vmatprep.subr.mxu0 0.0
    %135 = vmatpush1.msra.mxu0 %v96
    %136 = vmatprep.subr.mxu0 0.0
    %137 = vmatpush1.msra.mxu0 0.0
    %138 = vmatprep.subr.mxu0 0.0
    %139 = vmatpush1.msra.mxu0 0.0
    %140 = vmatprep.subr.mxu0 0.0
    %141 = vmatpush1.msra.mxu0 0.0
    %142 = vmatprep.subr.mxu0 0.0
    %143 = vmatpush1.msra.mxu0 0.0
    %144 = vmatprep.subr.mxu0 0.0
    %145 = vmatpush1.msra.mxu0 0.0
    %146 = vmatprep.subr.mxu0 0.0
    %147 = vmatpush1.msra.mxu0 0.0
    %148 = vmatprep.subr.mxu0 0.0
    %149 = vmatpush1.msra.mxu0 0.0
    %150 = vmatprep.subr.mxu0 0.0
    %151 = vmatpush1.msra.mxu0 0.0
    %152 = vmatprep.subr.mxu0 0.0
    %153 = vmatpush1.msra.mxu0 0.0
    %154 = vmatprep.subr.mxu0 0.0
    %155 = vmatpush1.msra.mxu0 0.0
    %156 = vmatprep.subr.mxu0 0.0
    %157 = vmatpush1.msra.mxu0 0.0
    %158 = vmatprep.subr.mxu0 0.0
    %159 = vmatpush1.msra.mxu0 0.0
    %160 = vmatprep.subr.mxu0 0.0
    %161 = vmatpush1.msra.mxu0 0.0
    %162 = vmatprep.subr.mxu0 0.0
    %163 = vmatpush1.msra.mxu0 0.0
    %164 = vmatprep.subr.mxu0 0.0
    %165 = vmatpush1.msra.mxu0 0.0
    %166 = vmatprep.subr.mxu0 0.0
    %167 = vmatpush1.msra.mxu0 0.0
    %168 = vmatprep.mubr.f32.mxu0 0.0
    %169 = vmatmul.mubr.f32.gmra.mrb[0].mxu0 %v80
    %v170 = vpop.f32.mrb[0].mxu0
    %v171 = vadd.f32 %v102, %v170
    %v172 = vpop.f32.mrb[0].mxu0
    %173 = vdwg.mxu0
    %v174 = vmul.f32 %v171, 0.5
    %v175 = vmul.f32 %v171, %v171
    %v176 = vmul.f32 %v175, %v171
    %v177 = vmul.f32 %v176, 0.044715
    %v178 = vadd.f32 %v171, %v177
    %v179 = vmul.f32 %v178, 0.7978846
    %v180 = vtanh.pop %v179
    %v181 = vadd.f32 %v180, 1.0
    %v182 = vmul.f32 %v174, %v181
    %v183 = vld [vmem:[#allocation7] sm:$0xff]
    %v184 = vld [vmem:[#allocation7 + $0x8] sm:$0xff]
    %v185 = vld [vmem:[#allocation7 + $0x10] sm:$0xff]
    %v186 = vld [vmem:[#allocation7 + $0x18] sm:$0xff]
    %v187 = vld [vmem:[#allocation7 + $0x20] sm:$0xff]
    %v188 = vld [vmem:[#allocation7 + $0x28] sm:$0xff]
    %v189 = vld [vmem:[#allocation7 + $0x30] sm:$0xff]
    %v190 = vld [vmem:[#allocation7 + $0x38] sm:$0xff]
    %v191 = vld [vmem:[#allocation7 + $0x40] sm:$0xff]
    %v192 = vld [vmem:[#allocation7 + $0x48] sm:$0xff]
    %v193 = vld [vmem:[#allocation7 + $0x50] sm:$0xff]
    %v194 = vld [vmem:[#allocation7 + $0x58] sm:$0xff]
    %v195 = vld [vmem:[#allocation7 + $0x60] sm:$0xff]
    %v196 = vld [vmem:[#allocation7 + $0x68] sm:$0xff]
    %v197 = vld [vmem:[#allocation7 + $0x70] sm:$0xff]
    %v198 = vld [vmem:[#allocation7 + $0x78] sm:$0xff]
    %v199 = vld [vmem:[%s4] sm:$0x1]
    %v201 = vlaneseq
    %v202 = vshrl.u32 %v201, 7
    %v203 = vsub.s32 0, %v202
    %v204 = vrot.slane %v199, %v203
    %206 = vmatprep.subr.mxu0 0.0
    %207 = vmatpush1.msra.mxu0 %v183
    %208 = vmatprep.subr.mxu0 0.0
    %209 = vmatpush1.msra.mxu0 %v184
    %210 = vmatprep.subr.mxu0 0.0
    %211 = vmatpush1.msra.mxu0 %v185
    %212 = vmatprep.subr.mxu0 0.0
    %213 = vmatpush1.msra.mxu0 %v186
    %214 = vmatprep.subr.mxu0 0.0
    %215 = vmatpush1.msra.mxu0 %v187
    %216 = vmatprep.subr.mxu0 0.0
    %217 = vmatpush1.msra.mxu0 %v188
    %218 = vmatprep.subr.mxu0 0.0
    %219 = vmatpush1.msra.mxu0 %v189
    %220 = vmatprep.subr.mxu0 0.0
    %221 = vmatpush1.msra.mxu0 %v190
    %222 = vmatprep.subr.mxu0 0.0
    %223 = vmatpush1.msra.mxu0 %v191
    %224 = vmatprep.subr.mxu0 0.0
    %225 = vmatpush1.msra.mxu0 %v192
    %226 = vmatprep.subr.mxu0 0.0
    %227 = vmatpush1.msra.mxu0 %v193
    %228 = vmatprep.subr.mxu0 0.0
    %229 = vmatpush1.msra.mxu0 %v194
    %230 = vmatprep.subr.mxu0 0.0
    %231 = vmatpush1.msra.mxu0 %v195
    %232 = vmatprep.subr.mxu0 0.0
    %233 = vmatpush1.msra.mxu0 %v196
    %234 = vmatprep.subr.mxu0 0.0
    %235 = vmatpush1.msra.mxu0 %v197
    %236 = vmatprep.subr.mxu0 0.0
    %237 = vmatpush1.msra.mxu0 %v198
    %238 = vmatprep.subr.mxu0 0.0
    %239 = vmatpush1.msra.mxu0 0.0
    %240 = vmatprep.subr.mxu0 0.0
    %241 = vmatpush1.msra.mxu0 0.0
    %242 = vmatprep.subr.mxu0 0.0
    %243 = vmatpush1.msra.mxu0 0.0
    %244 = vmatprep.subr.mxu0 0.0
    %245 = vmatpush1.msra.mxu0 0.0
    %246 = vmatprep.subr.mxu0 0.0
    %247 = vmatpush1.msra.mxu0 0.0
    %248 = vmatprep.subr.mxu0 0.0
    %249 = vmatpush1.msra.mxu0 0.0
    %250 = vmatprep.subr.mxu0 0.0
    %251 = vmatpush1.msra.mxu0 0.0
    %252 = vmatprep.subr.mxu0 0.0
    %253 = vmatpush1.msra.mxu0 0.0
    %254 = vmatprep.subr.mxu0 0.0
    %255 = vmatpush1.msra.mxu0 0.0
    %256 = vmatprep.subr.mxu0 0.0
    %257 = vmatpush1.msra.mxu0 0.0
    %258 = vmatprep.subr.mxu0 0.0
    %259 = vmatpush1.msra.mxu0 0.0
    %260 = vmatprep.subr.mxu0 0.0
    %261 = vmatpush1.msra.mxu0 0.0
    %262 = vmatprep.subr.mxu0 0.0
    %263 = vmatpush1.msra.mxu0 0.0
    %264 = vmatprep.subr.mxu0 0.0
    %265 = vmatpush1.msra.mxu0 0.0
    %266 = vmatprep.subr.mxu0 0.0
    %267 = vmatpush1.msra.mxu0 0.0
    %268 = vmatprep.subr.mxu0 0.0
    %269 = vmatpush1.msra.mxu0 0.0
    %270 = vmatprep.mubr.f32.mxu0 0.0
    %271 = vmatmul.mubr.f32.gmra.mrb[0].mxu0 %v182
    %v272 = vpop.f32.mrb[0].mxu0
    %v273 = vadd.f32 %v204, %v272
    %v274 = vpop.f32.mrb[0].mxu0
    %275 = vdwg.mxu0
    %v276 = vmul.f32 %v273, 0.5
    %v277 = vmul.f32 %v273, %v273
    %v278 = vmul.f32 %v277, %v273
    %v279 = vmul.f32 %v278, 0.044715
    %v280 = vadd.f32 %v273, %v279
    %v281 = vmul.f32 %v280, 0.7978846
    %v282 = vtanh.pop %v281
    %v283 = vadd.f32 %v282, 1.0
    %v284 = vmul.f32 %v276, %v283
    %v285 = vld [vmem:[#allocation8] sm:$0xff]
    %v286 = vld [vmem:[#allocation8 + $0x8] sm:$0xff]
    %v287 = vld [vmem:[#allocation8 + $0x10] sm:$0xff]
    %v288 = vld [vmem:[#allocation8 + $0x18] sm:$0xff]
    %v289 = vld [vmem:[#allocation8 + $0x20] sm:$0xff]
    %v290 = vld [vmem:[#allocation8 + $0x28] sm:$0xff]
    %v291 = vld [vmem:[#allocation8 + $0x30] sm:$0xff]
    %v292 = vld [vmem:[#allocation8 + $0x38] sm:$0xff]
    %v293 = vld [vmem:[#allocation8 + $0x40] sm:$0xff]
    %v294 = vld [vmem:[#allocation8 + $0x48] sm:$0xff]
    %v295 = vld [vmem:[#allocation8 + $0x50] sm:$0xff]
    %v296 = vld [vmem:[#allocation8 + $0x58] sm:$0xff]
    %v297 = vld [vmem:[#allocation8 + $0x60] sm:$0xff]
    %v298 = vld [vmem:[#allocation8 + $0x68] sm:$0xff]
    %v299 = vld [vmem:[#allocation8 + $0x70] sm:$0xff]
    %v300 = vld [vmem:[#allocation8 + $0x78] sm:$0xff]
    %v301 = vld [vmem:[%s6] sm:$0x1]
    %v303 = vlaneseq
    %v304 = vshrl.u32 %v303, 7
    %v305 = vsub.s32 0, %v304
    %v306 = vrot.slane %v301, %v305
    %308 = vmatprep.subr.mxu0 0.0
    %309 = vmatpush1.msra.mxu0 %v285
    %310 = vmatprep.subr.mxu0 0.0
    %311 = vmatpush1.msra.mxu0 %v286
    %312 = vmatprep.subr.mxu0 0.0
    %313 = vmatpush1.msra.mxu0 %v287
    %314 = vmatprep.subr.mxu0 0.0
    %315 = vmatpush1.msra.mxu0 %v288
    %316 = vmatprep.subr.mxu0 0.0
    %317 = vmatpush1.msra.mxu0 %v289
    %318 = vmatprep.subr.mxu0 0.0
    %319 = vmatpush1.msra.mxu0 %v290
    %320 = vmatprep.subr.mxu0 0.0
    %321 = vmatpush1.msra.mxu0 %v291
    %322 = vmatprep.subr.mxu0 0.0
    %323 = vmatpush1.msra.mxu0 %v292
    %324 = vmatprep.subr.mxu0 0.0
    %325 = vmatpush1.msra.mxu0 %v293
    %326 = vmatprep.subr.mxu0 0.0
    %327 = vmatpush1.msra.mxu0 %v294
    %328 = vmatprep.subr.mxu0 0.0
    %329 = vmatpush1.msra.mxu0 %v295
    %330 = vmatprep.subr.mxu0 0.0
    %331 = vmatpush1.msra.mxu0 %v296
    %332 = vmatprep.subr.mxu0 0.0
    %333 = vmatpush1.msra.mxu0 %v297
    %334 = vmatprep.subr.mxu0 0.0
    %335 = vmatpush1.msra.mxu0 %v298
    %336 = vmatprep.subr.mxu0 0.0
    %337 = vmatpush1.msra.mxu0 %v299
    %338 = vmatprep.subr.mxu0 0.0
    %339 = vmatpush1.msra.mxu0 %v300
    %340 = vmatprep.subr.mxu0 0.0
    %341 = vmatpush1.msra.mxu0 0.0
    %342 = vmatprep.subr.mxu0 0.0
    %343 = vmatpush1.msra.mxu0 0.0
    %344 = vmatprep.subr.mxu0 0.0
    %345 = vmatpush1.msra.mxu0 0.0
    %346 = vmatprep.subr.mxu0 0.0
    %347 = vmatpush1.msra.mxu0 0.0
    %348 = vmatprep.subr.mxu0 0.0
    %349 = vmatpush1.msra.mxu0 0.0
    %350 = vmatprep.subr.mxu0 0.0
    %351 = vmatpush1.msra.mxu0 0.0
    %352 = vmatprep.subr.mxu0 0.0
    %353 = vmatpush1.msra.mxu0 0.0
    %354 = vmatprep.subr.mxu0 0.0
    %355 = vmatpush1.msra.mxu0 0.0
    %356 = vmatprep.subr.mxu0 0.0
    %357 = vmatpush1.msra.mxu0 0.0
    %358 = vmatprep.subr.mxu0 0.0
    %359 = vmatpush1.msra.mxu0 0.0
    %360 = vmatprep.subr.mxu0 0.0
    %361 = vmatpush1.msra.mxu0 0.0
    %362 = vmatprep.subr.mxu0 0.0
    %363 = vmatpush1.msra.mxu0 0.0
    %364 = vmatprep.subr.mxu0 0.0
    %365 = vmatpush1.msra.mxu0 0.0
    %366 = vmatprep.subr.mxu0 0.0
    %367 = vmatpush1.msra.mxu0 0.0
    %368 = vmatprep.subr.mxu0 0.0
    %369 = vmatpush1.msra.mxu0 0.0
    %370 = vmatprep.subr.mxu0 0.0
    %371 = vmatpush1.msra.mxu0 0.0
    %372 = vmatprep.mubr.f32.mxu0 0.0
    %373 = vmatmul.mubr.f32.gmra.mrb[0].mxu0 %v284
    %v374 = vpop.f32.mrb[0].mxu0
    %v375 = vadd.f32 %v306, %v374
    %v376 = vpop.f32.mrb[0].mxu0
    %377 = vdwg.mxu0
    %378 = vst [vmem:[#allocation10] sm:$0xff] %v375
    // Predicated region
    $region46: #{tpu_custom_call.1} parent=1 // pred_check
      _
    $region47: #{tpu_custom_call.1} parent=1 // pred_check_branch
      %380 = sbr.rel (0) target = $region49
    $region48: #{tpu_custom_call.1} parent=1 // pred_region
      %s382 = ssub.s32 128, 128
      %383 = vsyncadd [#allocation4], %s382
      %s385 = sshll.u32 [#allocation10], 4
      %s386 = int_to_ptr.vmem [resolvable:$true] %s385
      %388 = dma.vmem_to_hbm [thread:$0]  %s386, 128, %s7, [#allocation4]
    $region49: #{tpu_custom_call.1} parent=1 // pred_fallthru
      _
    // Predicated region
    $region50: #{tpu_custom_call.1} parent=1 // pred_check
      _
    $region51: #{tpu_custom_call.1} parent=1 // pred_check_branch
      %390 = sbr.rel (0) target = $region53
    $region52: #{tpu_custom_call.1} parent=1 // pred_region
      %391 = dma.done [#allocation4], 128
    $region53: #{tpu_custom_call.1} parent=1 // pred_fallthru
      _
    %392 = vsyncpa [#allocation3], 1
    %393 = vsyncpa [#allocation6], 1
    %394 = vsyncpa [#allocation9], 1
    %395 = vsyncpa [#allocation4], 1

</llo_original>
